<compile_context>
chip_gen: v5e
topology: v5e:2x2
jax: 0.10.0
libtpu: 0.0.40
codegen_flags: <defaults>
</compile_context>

<pallas_src>
import functools

import jax
import jax.numpy as jnp
from jax import lax
from jax.experimental import pallas as pl
from jax.experimental.pallas import tpu as pltpu


# ----------------------------- tiling helpers -------------------------------

def _round_up(x, m):
    return (x + m - 1) // m * m


def _row_tile(M, target, mult=16):
    """Pick (padded_M, tile_M).  Rows are padded so the tile divides exactly
    and sublane counts stay aligned; never collapses to one giant block."""
    if M < target:
        Mp = _round_up(M, mult)
        return Mp, Mp
    Mp = _round_up(M, target)          # <= target-1 wasted rows
    return Mp, target


def _pick_tile(dim, target, mult=128):
    """Largest multiple of `mult` <= target that divides `dim` (dim % mult == 0)."""
    assert dim % mult == 0, (dim, mult)
    t = min(target, dim)
    t -= t % mult
    t = max(t, mult)
    while dim % t:
        t -= mult
    return t


def _pad_rows(x, m_pad, fill=0):
    M = x.shape[0]
    if m_pad == M:
        return x
    pad = [(0, m_pad - M)] + [(0, 0)] * (x.ndim - 1)
    return jnp.pad(x, pad, constant_values=fill)


# ----------------------------- Pallas kernels -------------------------------

def _ln_matmul_kernel(x_ref, g_ref, b_ref, w_ref, o_ref, xn_sc, *, eps, activation):
    """LayerNorm(x) @ w with optional GELU.  LN hoisted: xn computed once at
    j==0 into a bf16 VMEM scratch and reused for every N tile."""
    @pl.when(pl.program_id(1) == 0)
    def _():
        x = x_ref[...]                                          # [tm, K] f32
        mu = jnp.mean(x, axis=-1, keepdims=True)
        var = jnp.mean((x - mu) ** 2, axis=-1, keepdims=True)
        xn = (x - mu) * lax.rsqrt(var + eps) * g_ref[...] + b_ref[...]
        xn_sc[...] = xn.astype(xn_sc.dtype)

    out = jnp.dot(xn_sc[...], w_ref[...],
                  preferred_element_type=jnp.float32)           # [tm, tn] f32
    if activation == "gelu":
        out = jax.nn.gelu(out)
    o_ref[...] = out.astype(o_ref.dtype)


def ln_dense(x, g, b, w, *, tm=256, tn=512, activation=None,
             out_dtype=jnp.float32):
    """Fused LayerNorm + matmul.  x: [M, K] f32, w: [K, N] bf16 -> [M, N]."""
    M, K = x.shape
    K2, N = w.shape
    assert K == K2 and K % 128 == 0 and N % 128 == 0
    Mp, tm = _row_tile(M, tm)
    tn = _pick_tile(N, tn)
    xp = _pad_rows(x, Mp)
    kern = functools.partial(_ln_matmul_kernel, eps=1e-5, activation=activation)
    out = pl.pallas_call(
        kern,
        out_shape=jax.ShapeDtypeStruct((Mp, N), out_dtype),
        grid=(Mp // tm, N // tn),
        in_specs=[pl.BlockSpec((tm, K), lambda i, j: (i, 0)),
                  pl.BlockSpec((1, K), lambda i, j: (0, 0)),
                  pl.BlockSpec((1, K), lambda i, j: (0, 0)),
                  pl.BlockSpec((K, tn), lambda i, j: (0, j))],
        out_specs=pl.BlockSpec((tm, tn), lambda i, j: (i, j)),
        scratch_shapes=[pltpu.VMEM((tm, K), jnp.bfloat16)],
        # j must be sequential (scratch reuse), so it is "arbitrary".
        compiler_params=pltpu.CompilerParams(
            dimension_semantics=("parallel", "arbitrary")),
    )(xp, g.reshape(1, K), b.reshape(1, K), w)
    return out[:M] if Mp != M else out


def _matmul_res_kernel(x_ref, w_ref, res_ref, o_ref, acc_ref):
    """Tiled bf16 matmul with f32 accumulator; residual add fused into the
    finalize step."""
    @pl.when(pl.program_id(2) == 0)
    def _():
        acc_ref[...] = jnp.zeros_like(acc_ref)

    acc_ref[...] += jnp.dot(x_ref[...].astype(jnp.bfloat16), w_ref[...],
                            preferred_element_type=jnp.float32)

    @pl.when(pl.program_id(2) == pl.num_programs(2) - 1)
    def _():
        o_ref[...] = (acc_ref[...] + res_ref[...].astype(jnp.float32)
                      ).astype(o_ref.dtype)


def dense_residual(x, w, res, *, tm=256, tn=512, tk=512, out_dtype=jnp.float32):
    """(x @ w) + res, tiled over M/N/K.  x bf16-ish [M,K], w [K,N] bf16,
    res [M,N] f32 (the residual stream)."""
    M, K = x.shape
    K2, N = w.shape
    assert K == K2 and K % 128 == 0 and N % 128 == 0
    assert res.shape == (M, N)
    Mp, tm = _row_tile(M, tm)
    tn = _pick_tile(N, tn)
    tk = _pick_tile(K, tk)
    xp = _pad_rows(x, Mp)
    rp = _pad_rows(res, Mp)
    out = pl.pallas_call(
        _matmul_res_kernel,
        out_shape=jax.ShapeDtypeStruct((Mp, N), out_dtype),
        grid=(Mp // tm, N // tn, K // tk),
        in_specs=[pl.BlockSpec((tm, tk), lambda i, j, k: (i, k)),
                  pl.BlockSpec((tk, tn), lambda i, j, k: (k, j)),
                  pl.BlockSpec((tm, tn), lambda i, j, k: (i, j))],
        out_specs=pl.BlockSpec((tm, tn), lambda i, j, k: (i, j)),
        scratch_shapes=[pltpu.VMEM((tm, tn), jnp.float32)],
        compiler_params=pltpu.CompilerParams(
            dimension_semantics=("parallel", "parallel", "arbitrary")),
    )(xp, w, rp)
    return out[:M] if Mp != M else out


def _attention_kernel(q_ref, k_ref, v_ref, mask_ref, o_ref, *, causal):
    """Masked softmax attention for a block of batch rows; bias built
    in-kernel from the padding mask (+ causal iota compare).  The 1/sqrt(H)
    scale is folded into W_q at init."""
    q = q_ref[...]                                            # [Bt, L, H] bf16
    k = k_ref[...]
    v = v_ref[...]
    s = jnp.einsum("bqd,bkd->bqk", q, k,
                   preferred_element_type=jnp.float32)        # [Bt, L, L] f32
    key_ok = jnp.broadcast_to(mask_ref[...] == 1, s.shape)    # [Bt, L, L] bool
    if causal:
        rows = lax.broadcasted_iota(jnp.int32, s.shape, 1)
        cols = lax.broadcasted_iota(jnp.int32, s.shape, 2)
        key_ok = jnp.logical_and(key_ok, rows >= cols)
    s = jnp.where(key_ok, s, -1e30)
    s = s - jnp.max(s, axis=-1, keepdims=True)
    p = jnp.exp(s)
    p = p * pl.reciprocal(jnp.sum(p, axis=-1, keepdims=True), approx=True)
    o = jnp.einsum("bqk,bkd->bqd", p.astype(jnp.bfloat16), v,
                   preferred_element_type=jnp.float32)
    o_ref[...] = o.astype(o_ref.dtype)
    # NOTE: fully-padded query rows get a uniform softmax; they are never
    # gathered or scored (labels == -100), matching the original semantics.


def attention(qkv, mask3, *, causal, bt=8):
    """qkv: [B, L, 3H] bf16 (fused Q|K|V columns); mask3: [B, 1, L] int32
    padding mask -> [B, L, H] bf16.  Batch rows are packed per grid step."""
    B, L, H3 = qkv.shape
    H = H3 // 3
    bt = min(bt, B)
    while B % bt:
        bt -= 1
    kern = functools.partial(_attention_kernel, causal=causal)
    # q/k/v are read from the same fused array via column-offset block indices.
    return pl.pallas_call(
        kern,
        out_shape=jax.ShapeDtypeStruct((B, L, H), jnp.bfloat16),
        grid=(B // bt,),
        in_specs=[pl.BlockSpec((bt, L, H), lambda i: (i, 0, 0)),
                  pl.BlockSpec((bt, L, H), lambda i: (i, 0, 1)),
                  pl.BlockSpec((bt, L, H), lambda i: (i, 0, 2)),
                  pl.BlockSpec((bt, 1, L), lambda i: (i, 0, 0))],
        out_specs=pl.BlockSpec((bt, L, H), lambda i: (i, 0, 0)),
        compiler_params=pltpu.CompilerParams(dimension_semantics=("parallel",)),
    )(qkv, qkv, qkv, mask3)


def _lmhead_ce_kernel(x_ref, g_ref, b_ref, w_ref, lab_ref,
                      logits_ref, nll_ref, valid_ref,
                      xn_sc, m_sc, l_sc, p_sc, *, eps, tv):
    """Fused final-LN + LM-head matmul + shifted-CE with online logsumexp.

    Grid = (row tiles, vocab tiles); vocab is the (arbitrary) reduction axis.
    Logits are written out (bf16) tile-by-tile; CE math stays f32 and the
    logits are never re-read from HBM."""
    j = pl.program_id(1)

    @pl.when(j == 0)
    def _():
        x = x_ref[...]                                        # [tm, H] f32
        mu = jnp.mean(x, axis=-1, keepdims=True)
        var = jnp.mean((x - mu) ** 2, axis=-1, keepdims=True)
        xn = (x - mu) * lax.rsqrt(var + eps) * g_ref[...] + b_ref[...]
        xn_sc[...] = xn.astype(xn_sc.dtype)
        m_sc[...] = jnp.full_like(m_sc, -jnp.inf)
        l_sc[...] = jnp.zeros_like(l_sc)
        p_sc[...] = jnp.zeros_like(p_sc)

    logits = jnp.dot(xn_sc[...], w_ref[...],
                     preferred_element_type=jnp.float32)      # [tm, tv] f32
    logits_ref[...] = logits.astype(logits_ref.dtype)

    labels = lab_ref[...]                                     # [tm, 1] int32
    cols = lax.broadcasted_iota(jnp.int32, logits.shape, 1) + j * tv
    p_sc[...] += jnp.sum(jnp.where(cols == labels, logits, 0.0),
                         axis=-1, keepdims=True)

    m_prev = m_sc[...]
    m_new = jnp.maximum(m_prev, jnp.max(logits, axis=-1, keepdims=True))
    l_sc[...] = l_sc[...] * jnp.exp(m_prev - m_new) + jnp.sum(
        jnp.exp(logits - m_new), axis=-1, keepdims=True)
    m_sc[...] = m_new

    @pl.when(j == pl.num_programs(1) - 1)
    def _():
        valid = (labels != -100).astype(jnp.float32)
        nll_ref[...] = (m_sc[...] + jnp.log(l_sc[...]) - p_sc[...]) * valid
        valid_ref[...] = valid


def lm_head_with_loss(x, g, b, w, labels, *, tm=512, tv=512):
    """x: [M, H] f32 (pre-final-LN), w: [H, V] bf16, labels: [M] int32
    (-100 = ignore).  Returns (logits [M, V] bf16, nll [M, 1], valid [M, 1])."""
    M, H = x.shape
    H2, V = w.shape
    assert H == H2 and H % 128 == 0 and V % 128 == 0
    Mp, tm = _row_tile(M, tm)           # larger tm => fewer LM-head weight re-reads
    tv = _pick_tile(V, tv)
    xp = _pad_rows(x, Mp)
    labp = _pad_rows(labels.reshape(M, 1).astype(jnp.int32), Mp, fill=-100)
    kern = functools.partial(_lmhead_ce_kernel, eps=1e-5, tv=tv)
    logits, nll, valid = pl.pallas_call(
        kern,
        out_shape=(jax.ShapeDtypeStruct((Mp, V), jnp.bfloat16),
                   jax.ShapeDtypeStruct((Mp, 1), jnp.float32),
                   jax.ShapeDtypeStruct((Mp, 1), jnp.float32)),
        grid=(Mp // tm, V // tv),
        in_specs=[pl.BlockSpec((tm, H), lambda i, j: (i, 0)),
                  pl.BlockSpec((1, H), lambda i, j: (0, 0)),
                  pl.BlockSpec((1, H), lambda i, j: (0, 0)),
                  pl.BlockSpec((H, tv), lambda i, j: (0, j)),
                  pl.BlockSpec((tm, 1), lambda i, j: (i, 0))],
        out_specs=(pl.BlockSpec((tm, tv), lambda i, j: (i, j)),
                   pl.BlockSpec((tm, 1), lambda i, j: (i, 0)),
                   pl.BlockSpec((tm, 1), lambda i, j: (i, 0))),
        scratch_shapes=[pltpu.VMEM((tm, H), jnp.bfloat16),
                        pltpu.VMEM((tm, 1), jnp.float32),
                        pltpu.VMEM((tm, 1), jnp.float32),
                        pltpu.VMEM((tm, 1), jnp.float32)],
        compiler_params=pltpu.CompilerParams(
            dimension_semantics=("parallel", "arbitrary")),
    )(xp, g.reshape(1, H), b.reshape(1, H), w, labp)
    if Mp != M:
        logits, nll, valid = logits[:M], nll[:M], valid[:M]
    return logits, nll, valid


# ------------------------------ JAX glue ------------------------------------

def layer_norm(x, g, b, eps=1e-5):
    mu = jnp.mean(x, axis=-1, keepdims=True)
    var = jnp.mean((x - mu) ** 2, axis=-1, keepdims=True)
    return (x - mu) / jnp.sqrt(var + eps) * g + b


def init_model_params(key, vocab, hidden, ffn, with_lm_head):
    ks = jax.random.split(key, 6)

    def nrm(k, shape, scale=0.02):
        return scale * jax.random.normal(k, shape, jnp.float32)

    wqkv = nrm(ks[1], (hidden, 3 * hidden))
    # Fold the 1/sqrt(H) attention scale into the W_q columns.
    wqkv = wqkv.at[:, :hidden].multiply(1.0 / float(hidden) ** 0.5)

    p = {
        "embed": nrm(ks[0], (vocab, hidden)),
        "wqkv": wqkv.astype(jnp.bfloat16),
        "wo": nrm(ks[2], (hidden, hidden)).astype(jnp.bfloat16),
        "w1": nrm(ks[3], (hidden, ffn)).astype(jnp.bfloat16),
        "w2": nrm(ks[4], (ffn, hidden)).astype(jnp.bfloat16),
        "ln1_g": jnp.ones((hidden,), jnp.float32), "ln1_b": jnp.zeros((hidden,), jnp.float32),
        "ln2_g": jnp.ones((hidden,), jnp.float32), "ln2_b": jnp.zeros((hidden,), jnp.float32),
        "lnf_g": jnp.ones((hidden,), jnp.float32), "lnf_b": jnp.zeros((hidden,), jnp.float32),
    }
    if with_lm_head:
        p["lm_head"] = nrm(ks[5], (hidden, vocab)).astype(jnp.bfloat16)
    return p


def transformer_block(x, mask3, p, *, causal):
    """x: [B, L, H] f32 residual stream; mask3: [B, 1, L] int32 padding mask."""
    B, L, H = x.shape
    x2 = x.reshape(B * L, H)
    # Fused LN1 + QKV (single [H, 3H] bf16 matmul); output stays fused in bf16.
    qkv = ln_dense(x2, p["ln1_g"], p["ln1_b"], p["wqkv"],
                   out_dtype=jnp.bfloat16)                       # [B*L, 3H]
    a = attention(qkv.reshape(B, L, 3 * H), mask3, causal=causal)  # [B, L, H] bf16
    # Attention output projection with the residual add fused into the epilogue.
    x1 = dense_residual(a.reshape(B * L, H), p["wo"], x2)         # [B*L, H] f32
    # Fused LN2 + W1 + GELU (bf16 hidden), then W2 with fused residual add.
    h = ln_dense(x1, p["ln2_g"], p["ln2_b"], p["w1"],
                 activation="gelu", out_dtype=jnp.bfloat16)       # [B*L, F] bf16
    x3 = dense_residual(h, p["w2"], x1)                           # [B*L, H] f32
    return x3.reshape(B, L, H)


def encoder_hidden_pre_final_ln(input_ids, attention_mask, p):
    B, L = input_ids.shape
    x = jnp.take(p["embed"], input_ids, axis=0)
    mask3 = attention_mask.astype(jnp.int32).reshape(B, 1, L)
    return transformer_block(x, mask3, p, causal=False)


class InformationCompressModelPallas:
    def __init__(self, vocab_size, hidden, ffn, num_compress_token,
                 pad_token_id=0, seed=0):
        self.num_compress_token = num_compress_token
        self.vocab_size = vocab_size
        self.hidden = hidden
        self.pad_token_id = pad_token_id
        self.embed_token_ids = jnp.array(
            [vocab_size - num_compress_token + i for i in range(num_compress_token)],
            jnp.int32)
        k_enc, k_dec = jax.random.split(jax.random.PRNGKey(seed))
        self.encoder_params = init_model_params(k_enc, vocab_size, hidden, ffn,
                                                with_lm_head=False)
        self.decoder_params = init_model_params(k_dec, vocab_size, hidden, ffn,
                                                with_lm_head=True)

    def _compress(self, input_ids, attention_mask):
        B, Ls = input_ids.shape
        nc = self.num_compress_token
        lengths = jnp.sum(attention_mask, axis=1)                          # [B]
        embedding_ids = jnp.concatenate(
            [input_ids, jnp.full((B, nc), self.pad_token_id, input_ids.dtype)], axis=1)
        embedding_attention_mask = jnp.concatenate(
            [attention_mask, jnp.zeros((B, nc), attention_mask.dtype)], axis=1)
        insert_indices = lengths[:, None] + jnp.arange(nc, dtype=lengths.dtype)[None, :]
        batch_idx = jnp.arange(B)[:, None]
        embedding_ids = embedding_ids.at[batch_idx, insert_indices].set(
            jnp.broadcast_to(self.embed_token_ids[None, :], (B, nc)))
        embedding_attention_mask = embedding_attention_mask.at[
            batch_idx, insert_indices].set(1)
        hidden = encoder_hidden_pre_final_ln(embedding_ids,
                                             embedding_attention_mask,
                                             self.encoder_params)
        # Gather the <EMBED> positions first, then apply the (row-wise) final
        # LN only to the nc gathered rows (LN∘gather == gather∘LN).
        gathered = hidden[batch_idx, insert_indices]                        # [B, nc, H]
        compress_embedding = layer_norm(gathered,
                                        self.encoder_params["lnf_g"],
                                        self.encoder_params["lnf_b"])
        compress_attention_mask = jnp.ones((B, nc), jnp.int32)
        return compress_embedding, compress_attention_mask

    def forward(self, input_ids, attention_mask, target_ids,
                target_attention_mask, labels=None):
        compress_embedding, compress_attention_mask = self._compress(
            input_ids, attention_mask)
        target_embeddings = jnp.take(self.decoder_params["embed"], target_ids, axis=0)
        decoder_embeddings = jnp.concatenate(
            [compress_embedding, target_embeddings], axis=1)
        decoder_attention_mask = jnp.concatenate(
            [compress_attention_mask, target_attention_mask.astype(jnp.int32)], axis=1)

        B, L, H = decoder_embeddings.shape
        mask3 = decoder_attention_mask.reshape(B, 1, L)
        x = transformer_block(decoder_embeddings, mask3, self.decoder_params,
                              causal=True)
        x2 = x.reshape(B * L, H)

        p = self.decoder_params
        if labels is None:
            logits = ln_dense(x2, p["lnf_g"], p["lnf_b"], p["lm_head"],
                              out_dtype=jnp.float32).reshape(B, L, self.vocab_size)
            return None, logits

        # Shifted labels aligned per row: row (b, t) predicts labels[b, t+1];
        # the final row per batch gets -100 (ignored), matching
        # CrossEntropyLoss(ignore_index=-100) on logits[:, :-1] / labels[:, 1:].
        shift_labels = jnp.concatenate(
            [labels[:, 1:], jnp.full((B, 1), -100, labels.dtype)],
            axis=1).reshape(-1)
        logits, nll, valid = lm_head_with_loss(
            x2, p["lnf_g"], p["lnf_b"], p["lm_head"], shift_labels)
        loss = jnp.sum(nll) / jnp.maximum(jnp.sum(valid), 1.0)
        return loss, logits.reshape(B, L, self.vocab_size)


# -------------------------------- main ---------------------------------------

if __name__ == "__main__":
    B, Ls, Lt = 2, 8, 8
    H, FFN, V, NC = 128, 256, 1024, 1     # lane-dense dims (multiples of 128)

    key = jax.random.PRNGKey(0)
    k1, k2 = jax.random.split(key)

    input_ids = jax.random.randint(k1, (B, Ls), 1, V - NC, dtype=jnp.int32)
    lengths = jnp.array([6, 8], jnp.int32)
    attention_mask = (jnp.arange(Ls)[None, :] < lengths[:, None]).astype(jnp.int32)

    target_ids = jax.random.randint(k2, (B, Lt), 1, V - NC, dtype=jnp.int32)
    t_lengths = jnp.array([8, 5], jnp.int32)
    target_attention_mask = (jnp.arange(Lt)[None, :] < t_lengths[:, None]).astype(jnp.int32)

    # labels over the decoder sequence: -100 at compress positions and target padding.
    labels = jnp.concatenate(
        [jnp.full((B, NC), -100, jnp.int32),
         jnp.where(target_attention_mask == 1, target_ids, -100)], axis=1)

    model = InformationCompressModelPallas(
        vocab_size=V, hidden=H, ffn=FFN, num_compress_token=NC,
        pad_token_id=0, seed=0)

    loss, logits = model.forward(input_ids, attention_mask, target_ids,
                                 target_attention_mask, labels)
    (loss, logits) = jax.block_until_ready((loss, logits))

    assert logits.shape == (B, NC + Lt, V)
    assert bool(jnp.isfinite(loss))

    # Consistency check: the fused in-kernel CE (f32 math) must match CE
    # recomputed in plain JAX from the bf16 logits the same kernel emitted.
    shift_logits = logits[:, :-1, :].reshape(-1, V).astype(jnp.float32)
    shift_labels = labels[:, 1:].reshape(-1)
    valid = shift_labels != -100
    logp = jax.nn.log_softmax(shift_logits, axis=-1)
    picked = jnp.take_along_axis(
        logp, jnp.clip(shift_labels, 0, V - 1)[:, None], axis=-1)[:, 0]
    ref_loss = -jnp.sum(jnp.where(valid, picked, 0.0)) / jnp.maximum(
        jnp.sum(valid.astype(jnp.float32)), 1.0)
    # bf16 logits storage introduces ~1e-3 absolute error in the reference.
    assert abs(float(loss) - float(ref_loss)) < 2e-2, (float(loss), float(ref_loss))

    print("KERNEL_OK")
</pallas_src>

<mosaic_0001>
module attributes {stable_mosaic.version = 11 : i64} {
  func.func @_ln_matmul_kernel(%arg0: i32, %arg1: i32, %arg2: memref<32x128xf32, #tpu.memory_space<vmem>>, %arg3: memref<1x128xf32, #tpu.memory_space<vmem>>, %arg4: memref<1x128xf32, #tpu.memory_space<vmem>>, %arg5: memref<128x384xbf16, #tpu.memory_space<vmem>>, %arg6: memref<32x384xbf16, #tpu.memory_space<vmem>>, %arg7: memref<32x128xbf16, #tpu.memory_space<vmem>>) attributes {dimension_semantics = [#tpu.dimension_semantics<parallel>, #tpu.dimension_semantics<arbitrary>], iteration_bounds = array<i64: 1, 1>, scalar_prefetch = 0 : i64, scratch_operands = 1 : i64, tpu.core_type = #tpu.core_type<tc>, window_params = [{transform_indices = @transform_0, window_bounds = array<i64: 32, 128>}, {pipeline_mode = #tpu.pipeline_mode<synchronous>, transform_indices = @transform_1, window_bounds = array<i64: 1, 128>}, {pipeline_mode = #tpu.pipeline_mode<synchronous>, transform_indices = @transform_2, window_bounds = array<i64: 1, 128>}, {transform_indices = @transform_3, window_bounds = array<i64: 128, 384>}, {transform_indices = @transform_4, window_bounds = array<i64: 32, 384>}]} {
    %c0_i32 = arith.constant 0 : i32
    %0 = arith.cmpi eq, %arg1, %c0_i32 : i32
    %1 = arith.extui %0 : i1 to i32
    %c0_i32_0 = arith.constant 0 : i32
    %2 = arith.cmpi ne, %1, %c0_i32_0 : i32
    scf.if %2 {
      %c0_6 = arith.constant 0 : index
      %c0_7 = arith.constant 0 : index
      %8 = vector.load %arg2[%c0_6, %c0_7] : memref<32x128xf32, #tpu.memory_space<vmem>>, vector<32x128xf32>
      %cst_8 = arith.constant dense<0.000000e+00> : vector<32xf32>
      %9 = vector.multi_reduction <add>, %8, %cst_8 [1] : vector<32x128xf32> to vector<32xf32>
      %10 = vector.shape_cast %9 : vector<32xf32> to vector<32x1xf32>
      %cst_9 = arith.constant 1.280000e+02 : f32
      %11 = vector.broadcast %cst_9 : f32 to vector<32x1xf32>
      %12 = arith.divf %10, %11 : vector<32x1xf32>
      %13 = vector.broadcast %12 : vector<32x1xf32> to vector<32x128xf32>
      %14 = arith.subf %8, %13 : vector<32x128xf32>
      %15 = arith.mulf %14, %14 : vector<32x128xf32>
      %cst_10 = arith.constant dense<0.000000e+00> : vector<32xf32>
      %16 = vector.multi_reduction <add>, %15, %cst_10 [1] : vector<32x128xf32> to vector<32xf32>
      %17 = vector.shape_cast %16 : vector<32xf32> to vector<32x1xf32>
      %cst_11 = arith.constant 1.280000e+02 : f32
      %18 = vector.broadcast %cst_11 : f32 to vector<32x1xf32>
      %19 = arith.divf %17, %18 : vector<32x1xf32>
      %20 = vector.broadcast %12 : vector<32x1xf32> to vector<32x128xf32>
      %21 = arith.subf %8, %20 : vector<32x128xf32>
      %cst_12 = arith.constant 9.99999974E-6 : f32
      %22 = vector.broadcast %cst_12 : f32 to vector<32x1xf32>
      %23 = arith.addf %19, %22 : vector<32x1xf32>
      %24 = math.rsqrt %23 : vector<32x1xf32>
      %25 = vector.broadcast %24 : vector<32x1xf32> to vector<32x128xf32>
      %26 = arith.mulf %21, %25 : vector<32x128xf32>
      %c0_13 = arith.constant 0 : index
      %c0_14 = arith.constant 0 : index
      %27 = vector.load %arg3[%c0_13, %c0_14] : memref<1x128xf32, #tpu.memory_space<vmem>>, vector<1x128xf32>
      %28 = vector.broadcast %27 : vector<1x128xf32> to vector<32x128xf32>
      %29 = arith.mulf %26, %28 : vector<32x128xf32>
      %c0_15 = arith.constant 0 : index
      %c0_16 = arith.constant 0 : index
      %30 = vector.load %arg4[%c0_15, %c0_16] : memref<1x128xf32, #tpu.memory_space<vmem>>, vector<1x128xf32>
      %31 = vector.broadcast %30 : vector<1x128xf32> to vector<32x128xf32>
      %32 = arith.addf %29, %31 : vector<32x128xf32>
      %33 = arith.truncf %32 : vector<32x128xf32> to vector<32x128xbf16>
      %c0_17 = arith.constant 0 : index
      %c0_18 = arith.constant 0 : index
      %34 = vector.load %arg7[%c0_17, %c0_18] : memref<32x128xbf16, #tpu.memory_space<vmem>>, vector<32x128xbf16>
      tpu.vector_store %arg7[%c0_17, %c0_18], %33 {strides = array<i32>} : memref<32x128xbf16, #tpu.memory_space<vmem>>, vector<32x128xbf16>,
    } else {
    }
    %c0 = arith.constant 0 : index
    %c0_1 = arith.constant 0 : index
    %3 = vector.load %arg7[%c0, %c0_1] : memref<32x128xbf16, #tpu.memory_space<vmem>>, vector<32x128xbf16>
    %c0_2 = arith.constant 0 : index
    %c0_3 = arith.constant 0 : index
    %4 = vector.load %arg5[%c0_2, %c0_3] : memref<128x384xbf16, #tpu.memory_space<vmem>>, vector<128x384xbf16>
    %cst = arith.constant dense<0.000000e+00> : vector<32x384xf32>
    %5 = tpu.matmul %3, %4, %cst {dimension_numbers = #tpu.dot_dimension_numbers<[1], [0], [0], [1], [0, 0, 1, 1], [], []>} : vector<32x128xbf16>, vector<128x384xbf16>, vector<32x384xf32> -> vector<32x384xf32>
    %6 = arith.truncf %5 : vector<32x384xf32> to vector<32x384xbf16>
    %c0_4 = arith.constant 0 : index
    %c0_5 = arith.constant 0 : index
    %7 = vector.load %arg6[%c0_4, %c0_5] : memref<32x384xbf16, #tpu.memory_space<vmem>>, vector<32x384xbf16>
    tpu.vector_store %arg6[%c0_4, %c0_5], %6 {strides = array<i32>} : memref<32x384xbf16, #tpu.memory_space<vmem>>, vector<32x384xbf16>,
    return
  }
  func.func @transform_0(%arg0: i32, %arg1: i32) -> (i32, i32) {
    %c0_i32 = arith.constant 0 : i32
    %c0_i32_0 = arith.constant 0 : i32
    return %arg0, %c0_i32 : i32, i32
  }
  func.func @transform_1(%arg0: i32, %arg1: i32) -> (i32, i32) {
    %c0_i32 = arith.constant 0 : i32
    %c0_i32_0 = arith.constant 0 : i32
    %c0_i32_1 = arith.constant 0 : i32
    return %c0_i32, %c0_i32_0 : i32, i32
  }
  func.func @transform_2(%arg0: i32, %arg1: i32) -> (i32, i32) {
    %c0_i32 = arith.constant 0 : i32
    %c0_i32_0 = arith.constant 0 : i32
    %c0_i32_1 = arith.constant 0 : i32
    return %c0_i32, %c0_i32_0 : i32, i32
  }
  func.func @transform_3(%arg0: i32, %arg1: i32) -> (i32, i32) {
    %c0_i32 = arith.constant 0 : i32
    %c0_i32_0 = arith.constant 0 : i32
    return %c0_i32, %arg1 : i32, i32
  }
  func.func @transform_4(%arg0: i32, %arg1: i32) -> (i32, i32) {
    %c0_i32 = arith.constant 0 : i32
    return %arg0, %arg1 : i32, i32
  }
}

</mosaic_0001>

<llo_original>
// kernel: tpu_custom_call.1
$region0: #{tpu_custom_call.1}
  #allocation0 [shape = 'u32[]', space=smem, size = 0x4, offset = 0x4, fixed_abs, tag = 'smem constant byte address 0x4 - core index']
  #allocation1 [shape = 'u32[72,128]{1,0:T(1,128)}', space=vmem, size = 0x9000, scoped, tag = 'internal scratch']
  #allocation2 [shape = 'bf16[32,128]{1,0:T(8,128)(2,1)}', space=vmem, size = 0x2000, scoped, tag = 'scratch operand']
  %s0 = inlined_call_operand.hbm [shape: f32[32,128], index: 0, kind: input, shape index: {}]
  %s1 = inlined_call_operand.hbm [shape: f32[1,128], index: 1, kind: input, shape index: {}]
  %s2 = inlined_call_operand.vmem [shape: f32[1,128], index: 2, kind: input, shape index: {}]
  %s3 = inlined_call_operand.hbm [shape: bf16[128,384], index: 3, kind: input, shape index: {}]
  %s4 = inlined_call_operand.hbm [shape: bf16[32,384], index: 4, kind: output, shape index: {}]
  %s5 = sld [smem:[#allocation0]]
  $region42: #{tpu_custom_call.1} parent=0
    _
  %s7 = ssub.s32 1, %s5
  %s8 = scalar_select 0, %s7, %s5
  $region1: #{tpu_custom_call.1} parent=0
    #allocation3 [shape = 'u8[16384]{0}', space=vmem, size = 0x4000, scoped, tag = 'input window, operand 0, single buffered']
    #allocation4 [shape = 's32[1]{0}', space=sflag, size = 0x4, scoped, tag = 'scoped memory for tpu_custom_call.1']
    #allocation5 [shape = 's32[1]{0}', space=sflag, size = 0x4, scoped, tag = 'scoped memory for tpu_custom_call.1']
    #allocation6 [shape = 'u8[512]{0}', space=vmem, size = 0x400, scoped, tag = 'input window, operand 1, single buffered']
    #allocation7 [shape = 's32[1]{0}', space=sflag, size = 0x4, scoped, tag = 'scoped memory for tpu_custom_call.1']
    #allocation8 [shape = 'u8[98304]{0}', space=vmem, size = 0x18000, scoped, tag = 'input window, operand 3, single buffered']
    #allocation9 [shape = 'u8[24576]{0}', space=vmem, size = 0x6000, scoped, tag = 'output window, operand 0, single buffered']
    %9 = vsyncpa [#allocation4], 0
    %10 = vsyncpa [#allocation7], 0
    %11 = vsyncpa [#allocation5], 0
    // Predicated region
    $region2: #{tpu_custom_call.1} parent=1 // pred_check
      _
    $region3: #{tpu_custom_call.1} parent=1 // pred_check_branch
      %13 = sbr.rel (0) target = $region5
    $region4: #{tpu_custom_call.1} parent=1 // pred_region
      %15 = vsyncadd [#allocation4], 0
      %s16 = sshll.u32 %s0, 4
      %s17 = int_to_ptr.hbm [resolvable:$true] %s16
      %s18 = sshll.u32 [#allocation3], 4
      %s19 = int_to_ptr.vmem [resolvable:$true] %s18
      %24 = dma.hbm_to_vmem [thread:$0]  %s17, 512, %s19, [#allocation4], 128, 128, 8
    $region5: #{tpu_custom_call.1} parent=1 // pred_fallthru
      _
    // Predicated region
    $region6: #{tpu_custom_call.1} parent=1 // pred_check
      _
    $region7: #{tpu_custom_call.1} parent=1 // pred_check_branch
      %26 = sbr.rel (0) target = $region9
    $region8: #{tpu_custom_call.1} parent=1 // pred_region
      %28 = vsyncadd [#allocation7], 0
      %s30 = sshll.u32 %s1, 4
      %s31 = int_to_ptr.hbm [resolvable:$true] %s30
      %s32 = sshll.u32 [#allocation6], 4
      %s33 = int_to_ptr.vmem [resolvable:$true] %s32
      %35 = dma.hbm_to_vmem [thread:$0]  %s31, 16, %s33, [#allocation7]
    $region9: #{tpu_custom_call.1} parent=1 // pred_fallthru
      _
    // Predicated region
    $region10: #{tpu_custom_call.1} parent=1 // pred_check
      _
    $region11: #{tpu_custom_call.1} parent=1 // pred_check_branch
      %37 = sbr.rel (0) target = $region13
    $region12: #{tpu_custom_call.1} parent=1 // pred_region
      _
    $region13: #{tpu_custom_call.1} parent=1 // pred_fallthru
      _
    // Predicated region
    $region14: #{tpu_custom_call.1} parent=1 // pred_check
      _
    $region15: #{tpu_custom_call.1} parent=1 // pred_check_branch
      %39 = sbr.rel (0) target = $region17
    $region16: #{tpu_custom_call.1} parent=1 // pred_region
      %41 = vsyncadd [#allocation7], 0
      %s42 = sshll.u32 %s3, 4
      %s43 = int_to_ptr.hbm [resolvable:$true] %s42
      %s44 = sshll.u32 [#allocation8], 4
      %s45 = int_to_ptr.vmem [resolvable:$true] %s44
      %50 = dma.hbm_to_vmem [thread:$0]  %s43, 3072, %s45, [#allocation7], 192, 192, 12
    $region17: #{tpu_custom_call.1} parent=1 // pred_fallthru
      _
    // Predicated region
    $region18: #{tpu_custom_call.1} parent=1 // pred_check
      _
    $region19: #{tpu_custom_call.1} parent=1 // pred_check_branch
      %52 = sbr.rel (0) target = $region21
    $region20: #{tpu_custom_call.1} parent=1 // pred_region
      %54 = dma.done [#allocation4], 512
    $region21: #{tpu_custom_call.1} parent=1 // pred_fallthru
      _
    // Predicated region
    $region22: #{tpu_custom_call.1} parent=1 // pred_check
      _
    $region23: #{tpu_custom_call.1} parent=1 // pred_check_branch
      %56 = sbr.rel (0) target = $region25
    $region24: #{tpu_custom_call.1} parent=1 // pred_region
      %58 = dma.done [#allocation7], 16
    $region25: #{tpu_custom_call.1} parent=1 // pred_fallthru
      _
    // Predicated region
    $region26: #{tpu_custom_call.1} parent=1 // pred_check
      _
    $region27: #{tpu_custom_call.1} parent=1 // pred_check_branch
      %60 = sbr.rel (0) target = $region29
    $region28: #{tpu_custom_call.1} parent=1 // pred_region
      %62 = dma.done [#allocation7], 3072
    $region29: #{tpu_custom_call.1} parent=1 // pred_fallthru
      _
    %p63 = scmp.eq.s32.totalorder 0, 0
    // Predicated region
    $region30: #{tpu_custom_call.1} parent=1 // pred_check
      %p64 = pneg %p63
    $region31: #{tpu_custom_call.1} parent=1 // pred_check_branch
      %66 = sbr.rel (%p64) target = $region33
    $region32: #{tpu_custom_call.1} parent=1 // pred_region
      %v67 = vld [vmem:[#allocation3] sm:$0xff]
      %v68 = vld [vmem:[#allocation3 + $0x8] sm:$0xff]
      %v69 = vld [vmem:[#allocation3 + $0x10] sm:$0xff]
      %v70 = vld [vmem:[#allocation3 + $0x18] sm:$0xff]
      %71 = vadd.xlane.f32.xlu0 %v67
      %v72 = vpop.xlane.xlu0 %71
      %73 = vadd.xlane.f32.xlu0 %v68
      %v74 = vpop.xlane.xlu0 %73
      %75 = vadd.xlane.f32.xlu0 %v69
      %v76 = vpop.xlane.xlu0 %75
      %77 = vadd.xlane.f32.xlu0 %v70
      %v78 = vpop.xlane.xlu0 %77
      %v79 = vrcp.pop 128.0
      %v80 = vmul.f32 128.0, %v79
      %v81 = vsub.f32 1.0, %v80
      %v82 = vmul.f32 %v79, %v81
      %v83 = vadd.f32 %v79, %v82
      %vm84 = vweird.f32 %v79
      %v85 = vsel %vm84, %v79, %v83
      %v86 = vmul.f32 %v72, %v85
      %v87 = vmul.f32 %v74, %v85
      %v88 = vmul.f32 %v76, %v85
      %v89 = vmul.f32 %v78, %v85
      %v90 = vsub.f32 %v67, %v86
      %v91 = vsub.f32 %v68, %v87
      %v92 = vsub.f32 %v69, %v88
      %v93 = vsub.f32 %v70, %v89
      %v94 = vmul.f32 %v90, %v90
      %v95 = vmul.f32 %v91, %v91
      %v96 = vmul.f32 %v92, %v92
      %v97 = vmul.f32 %v93, %v93
      %98 = vadd.xlane.f32.xlu0 %v94
      %v99 = vpop.xlane.xlu0 %98
      %100 = vadd.xlane.f32.xlu0 %v95
      %v101 = vpop.xlane.xlu0 %100
      %102 = vadd.xlane.f32.xlu0 %v96
      %v103 = vpop.xlane.xlu0 %102
      %104 = vadd.xlane.f32.xlu0 %v97
      %v105 = vpop.xlane.xlu0 %104
      %v106 = vmul.f32 %v99, %v85
      %v107 = vmul.f32 %v101, %v85
      %v108 = vmul.f32 %v103, %v85
      %v109 = vmul.f32 %v105, %v85
      %v110 = vadd.f32 %v106, 1e-05
      %v111 = vadd.f32 %v107, 1e-05
      %v112 = vadd.f32 %v108, 1e-05
      %v113 = vadd.f32 %v109, 1e-05
      %v114 = vrsqrt.pop %v110
      %v115 = vmul.f32 %v114, %v110
      %v116 = vmul.f32 %v115, %v114
      %v117 = vmul.f32 0.5, %v116
      %v118 = vsub.f32 1.5, %v117
      %v119 = vmul.f32 %v114, %v118
      %vm120 = vweird.f32 %v110
      %vm121 = vweird.f32 %v114
      %vm122 = vmor %vm120, %vm121
      %v123 = vsel %vm122, %v114, %v119
      %v124 = vrsqrt.pop %v111
      %v125 = vmul.f32 %v124, %v111
      %v126 = vmul.f32 %v125, %v124
      %v127 = vmul.f32 0.5, %v126
      %v128 = vsub.f32 1.5, %v127
      %v129 = vmul.f32 %v124, %v128
      %vm130 = vweird.f32 %v111
      %vm131 = vweird.f32 %v124
      %vm132 = vmor %vm130, %vm131
      %v133 = vsel %vm132, %v124, %v129
      %v134 = vrsqrt.pop %v112
      %v135 = vmul.f32 %v134, %v112
      %v136 = vmul.f32 %v135, %v134
      %v137 = vmul.f32 0.5, %v136
      %v138 = vsub.f32 1.5, %v137
      %v139 = vmul.f32 %v134, %v138
      %vm140 = vweird.f32 %v112
      %vm141 = vweird.f32 %v134
      %vm142 = vmor %vm140, %vm141
      %v143 = vsel %vm142, %v134, %v139
      %v144 = vrsqrt.pop %v113
      %v145 = vmul.f32 %v144, %v113
      %v146 = vmul.f32 %v145, %v144
      %v147 = vmul.f32 0.5, %v146
      %v148 = vsub.f32 1.5, %v147
      %v149 = vmul.f32 %v144, %v148
      %vm150 = vweird.f32 %v113
      %vm151 = vweird.f32 %v144
      %vm152 = vmor %vm150, %vm151
      %v153 = vsel %vm152, %v144, %v149
      %v154 = vmul.f32 %v90, %v123
      %v155 = vmul.f32 %v91, %v133
      %v156 = vmul.f32 %v92, %v143
      %v157 = vmul.f32 %v93, %v153
      %v158 = vld [vmem:[#allocation6] sm:$0x1]
      %v160 = vperm.slane %v158, 0
      %v162 = vmul.f32 %v154, %v160
      %v163 = vmul.f32 %v155, %v160
      %v164 = vmul.f32 %v156, %v160
      %v165 = vmul.f32 %v157, %v160
      %v166 = vld [vmem:[%s2] sm:$0x1]
      %v168 = vperm.slane %v166, 0
      %v170 = vadd.f32 %v162, %v168
      %v171 = vadd.f32 %v163, %v168
      %v172 = vadd.f32 %v164, %v168
      %v173 = vadd.f32 %v165, %v168
      %v174 = vpack.c.bf16 %v170, %v170
      %v175 = vpack.c.bf16 %v171, %v171
      %v176 = vpack.c.bf16 %v172, %v172
      %v177 = vpack.c.bf16 %v173, %v173
      %178 = vst [vmem:[#allocation2] sm:$0xf] %v174
      %179 = vst [vmem:[#allocation2 + $0x4] sm:$0xf] %v175
      %180 = vst [vmem:[#allocation2 + $0x8] sm:$0xf] %v176
      %181 = vst [vmem:[#allocation2 + $0xc] sm:$0xf] %v177
    $region33: #{tpu_custom_call.1} parent=1 // pred_fallthru
      _
    %v182 = vld [vmem:[#allocation2] sm:$0xf]
    %v183 = vld [vmem:[#allocation2 + $0x4] sm:$0xf]
    %v184 = vld [vmem:[#allocation2 + $0x8] sm:$0xf]
    %v185 = vld [vmem:[#allocation2 + $0xc] sm:$0xf]
    %v186 = vld [vmem:[#allocation8] sm:$0xff]
    %v187 = vld [vmem:[#allocation8 + $0x8] sm:$0xf]
    %v188 = vld [vmem:[#allocation8 + $0xc] sm:$0xff]
    %v189 = vld [vmem:[#allocation8 + $0x14] sm:$0xf]
    %v190 = vld [vmem:[#allocation8 + $0x18] sm:$0xff]
    %v191 = vld [vmem:[#allocation8 + $0x20] sm:$0xf]
    %v192 = vld [vmem:[#allocation8 + $0x24] sm:$0xff]
    %v193 = vld [vmem:[#allocation8 + $0x2c] sm:$0xf]
    %v194 = vld [vmem:[#allocation8 + $0x30] sm:$0xff]
    %v195 = vld [vmem:[#allocation8 + $0x38] sm:$0xf]
    %v196 = vld [vmem:[#allocation8 + $0x3c] sm:$0xff]
    %v197 = vld [vmem:[#allocation8 + $0x44] sm:$0xf]
    %v198 = vld [vmem:[#allocation8 + $0x48] sm:$0xff]
    %v199 = vld [vmem:[#allocation8 + $0x50] sm:$0xf]
    %v200 = vld [vmem:[#allocation8 + $0x54] sm:$0xff]
    %v201 = vld [vmem:[#allocation8 + $0x5c] sm:$0xf]
    %v202 = vld [vmem:[#allocation8 + $0x60] sm:$0xff]
    %v203 = vld [vmem:[#allocation8 + $0x68] sm:$0xf]
    %v204 = vld [vmem:[#allocation8 + $0x6c] sm:$0xff]
    %v205 = vld [vmem:[#allocation8 + $0x74] sm:$0xf]
    %v206 = vld [vmem:[#allocation8 + $0x78] sm:$0xff]
    %v207 = vld [vmem:[#allocation8 + $0x80] sm:$0xf]
    %v208 = vld [vmem:[#allocation8 + $0x84] sm:$0xff]
    %v209 = vld [vmem:[#allocation8 + $0x8c] sm:$0xf]
    %v210 = vld [vmem:[#allocation8 + $0x90] sm:$0xff]
    %v211 = vld [vmem:[#allocation8 + $0x98] sm:$0xf]
    %v212 = vld [vmem:[#allocation8 + $0x9c] sm:$0xff]
    %v213 = vld [vmem:[#allocation8 + $0xa4] sm:$0xf]
    %v214 = vld [vmem:[#allocation8 + $0xa8] sm:$0xff]
    %v215 = vld [vmem:[#allocation8 + $0xb0] sm:$0xf]
    %v216 = vld [vmem:[#allocation8 + $0xb4] sm:$0xff]
    %v217 = vld [vmem:[#allocation8 + $0xbc] sm:$0xf]
    %v222 = vunpack.c.l.b16 %v182
    %v223 = vunpack.c.l.b16 %v183
    %v224 = vunpack.c.l.b16 %v184
    %v225 = vunpack.c.l.b16 %v185
    %v226 = vpack.c.b16 %v223, %v222
    %v227 = vpack.c.b16 %v225, %v224
    %v262 = vunpack.c.l.b16 %v186
    %v263 = vunpack.c.h.b16 %v186
    %v264 = vunpack.c.l.b16 %v187
    %v265 = vunpack.c.l.b16 %v188
    %v266 = vunpack.c.h.b16 %v188
    %v267 = vunpack.c.l.b16 %v189
    %v268 = vunpack.c.l.b16 %v190
    %v269 = vunpack.c.h.b16 %v190
    %v270 = vunpack.c.l.b16 %v191
    %v271 = vunpack.c.l.b16 %v192
    %v272 = vunpack.c.h.b16 %v192
    %v273 = vunpack.c.l.b16 %v193
    %v274 = vunpack.c.l.b16 %v194
    %v275 = vunpack.c.h.b16 %v194
    %v276 = vunpack.c.l.b16 %v195
    %v277 = vunpack.c.l.b16 %v196
    %v278 = vunpack.c.h.b16 %v196
    %v279 = vunpack.c.l.b16 %v197
    %v280 = vunpack.c.l.b16 %v198
    %v281 = vunpack.c.h.b16 %v198
    %v282 = vunpack.c.l.b16 %v199
    %v283 = vunpack.c.l.b16 %v200
    %v284 = vunpack.c.h.b16 %v200
    %v285 = vunpack.c.l.b16 %v201
    %v286 = vunpack.c.l.b16 %v202
    %v287 = vunpack.c.h.b16 %v202
    %v288 = vunpack.c.l.b16 %v203
    %v289 = vunpack.c.l.b16 %v204
    %v290 = vunpack.c.h.b16 %v204
    %v291 = vunpack.c.l.b16 %v205
    %v292 = vunpack.c.l.b16 %v206
    %v293 = vunpack.c.h.b16 %v206
    %v294 = vunpack.c.l.b16 %v207
    %v295 = vunpack.c.l.b16 %v208
    %v296 = vunpack.c.h.b16 %v208
    %v297 = vunpack.c.l.b16 %v209
    %v298 = vunpack.c.l.b16 %v210
    %v299 = vunpack.c.h.b16 %v210
    %v300 = vunpack.c.l.b16 %v211
    %v301 = vunpack.c.l.b16 %v212
    %v302 = vunpack.c.h.b16 %v212
    %v303 = vunpack.c.l.b16 %v213
    %v304 = vunpack.c.l.b16 %v214
    %v305 = vunpack.c.h.b16 %v214
    %v306 = vunpack.c.l.b16 %v215
    %v307 = vunpack.c.l.b16 %v216
    %v308 = vunpack.c.h.b16 %v216
    %v309 = vunpack.c.l.b16 %v217
    %v310 = vpack.c.b16 %v265, %v262
    %v311 = vpack.c.b16 %v266, %v263
    %v312 = vpack.c.b16 %v267, %v264
    %v313 = vpack.c.b16 %v271, %v268
    %v314 = vpack.c.b16 %v272, %v269
    %v315 = vpack.c.b16 %v273, %v270
    %v316 = vpack.c.b16 %v277, %v274
    %v317 = vpack.c.b16 %v278, %v275
    %v318 = vpack.c.b16 %v279, %v276
    %v319 = vpack.c.b16 %v283, %v280
    %v320 = vpack.c.b16 %v284, %v281
    %v321 = vpack.c.b16 %v285, %v282
    %v322 = vpack.c.b16 %v289, %v286
    %v323 = vpack.c.b16 %v290, %v287
    %v324 = vpack.c.b16 %v291, %v288
    %v325 = vpack.c.b16 %v295, %v292
    %v326 = vpack.c.b16 %v296, %v293
    %v327 = vpack.c.b16 %v297, %v294
    %v328 = vpack.c.b16 %v301, %v298
    %v329 = vpack.c.b16 %v302, %v299
    %v330 = vpack.c.b16 %v303, %v300
    %v331 = vpack.c.b16 %v307, %v304
    %v332 = vpack.c.b16 %v308, %v305
    %v333 = vpack.c.b16 %v309, %v306
    %358 = vmatpush.bf16.msra.mxu0 %v331
    %359 = vmatpush.bf16.msra.mxu0 %v328
    %360 = vmatpush.bf16.msra.mxu0 %v325
    %361 = vmatpush.bf16.msra.mxu0 %v322
    %362 = vmatpush.bf16.msra.mxu0 %v319
    %363 = vmatpush.bf16.msra.mxu0 %v316
    %364 = vmatpush.bf16.msra.mxu0 %v313
    %365 = vmatpush.bf16.msra.mxu0 %v310
    %366 = vmatmul.bf16.gmra.mxu0 %v226
    %v367 = vpop.f32.mrf.mxu0
    %v368 = vadd.f32 0.0, %v367
    %v369 = vpop.f32.mrf.mxu0
    %v370 = vadd.f32 0.0, %v369
    %371 = vmatmul.bf16.gmra.mxu0 %v227
    %v372 = vpop.f32.mrf.mxu0
    %v373 = vadd.f32 0.0, %v372
    %v374 = vpop.f32.mrf.mxu0
    %v375 = vadd.f32 0.0, %v374
    %376 = vdwg.mxu0
    %377 = vmatpush.bf16.msra.mxu0 %v332
    %378 = vmatpush.bf16.msra.mxu0 %v329
    %379 = vmatpush.bf16.msra.mxu0 %v326
    %380 = vmatpush.bf16.msra.mxu0 %v323
    %381 = vmatpush.bf16.msra.mxu0 %v320
    %382 = vmatpush.bf16.msra.mxu0 %v317
    %383 = vmatpush.bf16.msra.mxu0 %v314
    %384 = vmatpush.bf16.msra.mxu0 %v311
    %385 = vmatmul.bf16.gmra.mxu0 %v226
    %v386 = vpop.f32.mrf.mxu0
    %v387 = vadd.f32 0.0, %v386
    %v388 = vpop.f32.mrf.mxu0
    %v389 = vadd.f32 0.0, %v388
    %390 = vmatmul.bf16.gmra.mxu0 %v227
    %v391 = vpop.f32.mrf.mxu0
    %v392 = vadd.f32 0.0, %v391
    %v393 = vpop.f32.mrf.mxu0
    %v394 = vadd.f32 0.0, %v393
    %395 = vdwg.mxu0
    %396 = vmatpush.bf16.msra.mxu0 %v333
    %397 = vmatpush.bf16.msra.mxu0 %v330
    %398 = vmatpush.bf16.msra.mxu0 %v327
    %399 = vmatpush.bf16.msra.mxu0 %v324
    %400 = vmatpush.bf16.msra.mxu0 %v321
    %401 = vmatpush.bf16.msra.mxu0 %v318
    %402 = vmatpush.bf16.msra.mxu0 %v315
    %403 = vmatpush.bf16.msra.mxu0 %v312
    %404 = vmatmul.bf16.gmra.mxu0 %v226
    %v405 = vpop.f32.mrf.mxu0
    %v406 = vadd.f32 0.0, %v405
    %v407 = vpop.f32.mrf.mxu0
    %v408 = vadd.f32 0.0, %v407
    %409 = vmatmul.bf16.gmra.mxu0 %v227
    %v410 = vpop.f32.mrf.mxu0
    %v411 = vadd.f32 0.0, %v410
    %v412 = vpop.f32.mrf.mxu0
    %v413 = vadd.f32 0.0, %v412
    %414 = vdwg.mxu0
    %v415 = vpack.c.bf16 %v387, %v368
    %v416 = vpack.c.bf16 %v406, %v406
    %v417 = vpack.c.bf16 %v389, %v370
    %v418 = vpack.c.bf16 %v408, %v408
    %v419 = vpack.c.bf16 %v392, %v373
    %v420 = vpack.c.bf16 %v411, %v411
    %v421 = vpack.c.bf16 %v394, %v375
    %v422 = vpack.c.bf16 %v413, %v413
    %423 = vst [vmem:[#allocation9] sm:$0xff] %v415
    %424 = vst [vmem:[#allocation9 + $0x8] sm:$0xf] %v416
    %425 = vst [vmem:[#allocation9 + $0xc] sm:$0xff] %v417
    %426 = vst [vmem:[#allocation9 + $0x14] sm:$0xf] %v418
    %427 = vst [vmem:[#allocation9 + $0x18] sm:$0xff] %v419
    %428 = vst [vmem:[#allocation9 + $0x20] sm:$0xf] %v420
    %429 = vst [vmem:[#allocation9 + $0x24] sm:$0xff] %v421
    %430 = vst [vmem:[#allocation9 + $0x2c] sm:$0xf] %v422
    // Predicated region
    $region34: #{tpu_custom_call.1} parent=1 // pred_check
      _
    $region35: #{tpu_custom_call.1} parent=1 // pred_check_branch
      %432 = sbr.rel (0) target = $region37
    $region36: #{tpu_custom_call.1} parent=1 // pred_region
      %434 = vsyncadd [#allocation5], 0
      %s435 = sshll.u32 [#allocation9], 4
      %s436 = int_to_ptr.vmem [resolvable:$true] %s435
      %s437 = sshll.u32 %s4, 4
      %s438 = int_to_ptr.hbm [resolvable:$true] %s437
      %443 = dma.vmem_to_hbm [thread:$0]  %s436, 768, %s438, [#allocation5], 192, 192, 12
    $region37: #{tpu_custom_call.1} parent=1 // pred_fallthru
      _
    // Predicated region
    $region38: #{tpu_custom_call.1} parent=1 // pred_check
      _
    $region39: #{tpu_custom_call.1} parent=1 // pred_check_branch
      %445 = sbr.rel (0) target = $region41
    $region40: #{tpu_custom_call.1} parent=1 // pred_region
      %447 = dma.done [#allocation5], 768
    $region41: #{tpu_custom_call.1} parent=1 // pred_fallthru
      _
    %448 = vsyncpa [#allocation4], 1
    %449 = vsyncpa [#allocation7], 1
    %450 = vsyncpa [#allocation5], 1

</llo_original>
